<compile_context>
chip_gen: v5e
topology: v5e:2x2
jax: 0.10.0
libtpu: 0.0.40
codegen_flags: <defaults>
</compile_context>

<pallas_src>
import functools

import jax
import jax.numpy as jnp
from jax.experimental import pallas as pl
from jax.experimental.pallas import tpu as pltpu


def encoder_block_kernel(
    valid_lens_ref,                               # SMEM (B,) int32 (prefetch)
    x_ref,                                        # (Bt, S, H) f32
    wqkv_ref, bqkv_ref,                           # (H, 3H) bf16 / (1, 3H) f32
    wo_ref, bo_ref,                               # (H, H) bf16 / (1, H) f32
    g1_ref, be1_ref,                              # LayerNorm 1 gamma/beta (1,H)
    w1_ref, b1_ref, w2_ref, b2_ref,               # FFN (H,F)bf16/(1,F)/(F,H)bf16/(1,H)
    g2_ref, be2_ref,                              # LayerNorm 2 gamma/beta (1,H)
    out_ref,                                      # (Bt, S, H) f32
    *, num_heads,
):
    Bt, S, H = x_ref.shape
    M = Bt * S
    dh = H // num_heads
    scale = jnp.float32(1.0 / (dh ** 0.5))

    x = x_ref[...].astype(jnp.float32)            # (Bt, S, H)
    x2d = x.reshape(M, H)                         # residual stream, f32
    xb = x2d.astype(jnp.bfloat16)

    # --- fused Q/K/V projection: ONE (M, H) @ (H, 3H) matmul -----------------
    qkv = jnp.dot(xb, wqkv_ref[...],
                  preferred_element_type=jnp.float32) + bqkv_ref[...]
    q3 = qkv[:, 0 * H:1 * H].reshape(Bt, S, H).astype(jnp.bfloat16)
    k3 = qkv[:, 1 * H:2 * H].reshape(Bt, S, H).astype(jnp.bfloat16)
    v3 = qkv[:, 2 * H:3 * H].reshape(Bt, S, H).astype(jnp.bfloat16)

    # --- key-position mask per batch element in the tile (d2l masked_softmax)
    base = pl.program_id(0) * Bt
    key_pos = jax.lax.broadcasted_iota(jnp.int32, (Bt, S, S), 2)
    vl_rows = [jnp.full((1, S, S), valid_lens_ref[base + i], jnp.int32)
               for i in range(Bt)]
    vl_b = jnp.concatenate(vl_rows, axis=0)       # (Bt, S, S)
    mask = key_pos < vl_b

    # --- per-head attention (scores contraction is inherently dh) -----------
    heads = []
    for h in range(num_heads):
        lo = h * dh
        qh = q3[:, :, lo:lo + dh]                 # (Bt, S, dh)
        kh = k3[:, :, lo:lo + dh]
        vh = v3[:, :, lo:lo + dh]
        s = jnp.einsum('bqd,bkd->bqk', qh, kh,
                       preferred_element_type=jnp.float32) * scale
        s = jnp.where(mask, s, jnp.float32(-1e6))
        s = s - jnp.max(s, axis=-1, keepdims=True)
        p = jnp.exp(s)
        p = p * pl.reciprocal(jnp.sum(p, axis=-1, keepdims=True), approx=True)
        heads.append(jnp.einsum('bqk,bkd->bqd', p.astype(jnp.bfloat16), vh,
                                preferred_element_type=jnp.float32))
    ctx = jnp.concatenate(heads, axis=-1).reshape(M, H)     # concat(heads)
    attn = jnp.dot(ctx.astype(jnp.bfloat16), wo_ref[...],
                   preferred_element_type=jnp.float32) + bo_ref[...]

    # --- AddNorm 1 (dropout = identity in eval mode) -------------------------
    y = x2d + attn
    mu = jnp.mean(y, axis=-1, keepdims=True)
    var = jnp.mean((y - mu) ** 2, axis=-1, keepdims=True)
    y = (y - mu) * jax.lax.rsqrt(var + 1e-5) * g1_ref[...] + be1_ref[...]

    # --- position-wise FFN ----------------------------------------------------
    f = jnp.dot(y.astype(jnp.bfloat16), w1_ref[...],
                preferred_element_type=jnp.float32) + b1_ref[...]
    f = jnp.maximum(f, 0.0)
    f = jnp.dot(f.astype(jnp.bfloat16), w2_ref[...],
                preferred_element_type=jnp.float32) + b2_ref[...]

    # --- AddNorm 2 ------------------------------------------------------------
    z = y + f
    mu = jnp.mean(z, axis=-1, keepdims=True)
    var = jnp.mean((z - mu) ** 2, axis=-1, keepdims=True)
    z = (z - mu) * jax.lax.rsqrt(var + 1e-5) * g2_ref[...] + be2_ref[...]

    out_ref[...] = z.reshape(Bt, S, H).astype(out_ref.dtype)


def _full_spec(arr):
    n = arr.ndim
    return pl.BlockSpec(arr.shape, lambda *_args, _n=n: (0,) * _n)


def _pick_batch_tile(B, S, target_rows=256):
    """Smallest divisor Bt of B with Bt*S >= target_rows, else the whole batch."""
    for bt in range(1, B + 1):
        if B % bt == 0 and bt * S >= target_rows:
            return bt
    return B


def encoder_block(x, valid_lens, p, num_heads):
    """One d2l EncoderBlock applied to x (B, S, H) with per-batch valid_lens."""
    B, S, H = x.shape
    assert H % num_heads == 0
    Bt = _pick_batch_tile(B, S)

    # Fuse Q/K/V weights and biases once per call (tiny concat, done by XLA).
    wqkv = jnp.concatenate([p["wq"], p["wk"], p["wv"]], axis=1)   # (H, 3H) bf16
    bqkv = jnp.concatenate([p["bq"], p["bk"], p["bv"]], axis=1)   # (1, 3H) f32

    weights = [wqkv, bqkv, p["wo"], p["bo"],
               p["g1"], p["be1"],
               p["w1"], p["b1"], p["w2"], p["b2"],
               p["g2"], p["be2"]]

    # Explicit VMEM budget: weights (double-buffered worst case) + io blocks +
    # QKV/FFN intermediates, with headroom, capped below v7x's 64 MiB VMEM.
    nbytes = lambda a: a.size * a.dtype.itemsize
    F = p["w1"].shape[1]
    vmem_limit = int(min(
        64 * 1024 * 1024,
        max(16 * 1024 * 1024,
            2 * sum(nbytes(w) for w in weights)
            + 6 * Bt * S * H * 4 + 2 * Bt * S * F * 4 + (2 << 20))))

    grid_spec = pltpu.PrefetchScalarGridSpec(
        num_scalar_prefetch=1,
        grid=(B // Bt,),
        in_specs=[pl.BlockSpec((Bt, S, H), lambda b, vl: (b, 0, 0))]
                 + [_full_spec(w) for w in weights],
        out_specs=pl.BlockSpec((Bt, S, H), lambda b, vl: (b, 0, 0)),
    )
    return pl.pallas_call(
        functools.partial(encoder_block_kernel, num_heads=num_heads),
        out_shape=jax.ShapeDtypeStruct((B, S, H), jnp.float32),
        grid_spec=grid_spec,
        compiler_params=pltpu.CompilerParams(
            dimension_semantics=("parallel",),   # batch tiles are independent
            vmem_limit_bytes=vmem_limit),
    )(valid_lens, x, *weights)


def init_layer_params(key, H, F):
    """Fused-weight layout: (H,H)/(H,F)/(F,H) bf16 matrices, (1,·) f32 biases."""
    ks = jax.random.split(key, 6)
    std = 0.02
    bf = jnp.bfloat16
    return {
        "wq": (std * jax.random.normal(ks[0], (H, H), jnp.float32)).astype(bf),
        "bq": jnp.zeros((1, H), jnp.float32),
        "wk": (std * jax.random.normal(ks[1], (H, H), jnp.float32)).astype(bf),
        "bk": jnp.zeros((1, H), jnp.float32),
        "wv": (std * jax.random.normal(ks[2], (H, H), jnp.float32)).astype(bf),
        "bv": jnp.zeros((1, H), jnp.float32),
        "wo": (std * jax.random.normal(ks[3], (H, H), jnp.float32)).astype(bf),
        "bo": jnp.zeros((1, H), jnp.float32),
        "g1": jnp.ones((1, H), jnp.float32),
        "be1": jnp.zeros((1, H), jnp.float32),
        "w1": (std * jax.random.normal(ks[4], (H, F), jnp.float32)).astype(bf),
        "b1": jnp.zeros((1, F), jnp.float32),
        "w2": (std * jax.random.normal(ks[5], (F, H), jnp.float32)).astype(bf),
        "b2": jnp.zeros((1, H), jnp.float32),
        "g2": jnp.ones((1, H), jnp.float32),
        "be2": jnp.zeros((1, H), jnp.float32),
    }


def bert_encoder_forward(tokens, segments, valid_lens, params, num_heads):
    # Embedding glue (gathers) + positional embedding add, then Pallas blocks.
    S = tokens.shape[1]
    X = (params["tok_emb"][tokens]
         + params["seg_emb"][segments]
         + params["pos_emb"][:, :S, :])
    # TODO(synk): overlap next-layer weight HBM->VMEM DMA with the previous
    #             layer's compute via a cross-call prefetch (P10).
    for layer_p in params["layers"]:
        X = encoder_block(X, valid_lens, layer_p, num_heads)
    return X


if __name__ == "__main__":
    # Small BERT config.
    vocab_size, num_hiddens, num_heads, num_layers = 100, 32, 2, 2
    ffn_num_hiddens, max_len = 64, 64
    B, S = 2, 8

    key = jax.random.PRNGKey(0)
    k_tok, k_seg, k_pos, k_layers, k_in = jax.random.split(key, 5)

    params = {
        "tok_emb": 0.02 * jax.random.normal(k_tok, (vocab_size, num_hiddens),
                                            jnp.float32),
        "seg_emb": 0.02 * jax.random.normal(k_seg, (2, num_hiddens),
                                            jnp.float32),
        "pos_emb": 0.02 * jax.random.normal(k_pos, (1, max_len, num_hiddens),
                                            jnp.float32),
        "layers": [
            init_layer_params(k, num_hiddens, ffn_num_hiddens)
            for k in jax.random.split(k_layers, num_layers)
        ],
    }

    k_t, k_s = jax.random.split(k_in)
    tokens = jax.random.randint(k_t, (B, S), 0, vocab_size, dtype=jnp.int32)
    segments = jax.random.randint(k_s, (B, S), 0, 2, dtype=jnp.int32)
    valid_lens = jnp.array([S, 5], dtype=jnp.int32)

    out = bert_encoder_forward(tokens, segments, valid_lens, params, num_heads)
    out = jax.block_until_ready(out)
    assert out.shape == (B, S, num_hiddens)
    assert bool(jnp.all(jnp.isfinite(out)))
    print("KERNEL_OK")
</pallas_src>

<mosaic_0001>
module attributes {stable_mosaic.version = 11 : i64} {
  func.func @encoder_block_kernel(%arg0: i32, %arg1: memref<2xi32, #tpu.memory_space<smem>>, %arg2: memref<2x8x32xf32, #tpu.memory_space<vmem>>, %arg3: memref<32x96xbf16, #tpu.memory_space<vmem>>, %arg4: memref<1x96xf32, #tpu.memory_space<vmem>>, %arg5: memref<32x32xbf16, #tpu.memory_space<vmem>>, %arg6: memref<1x32xf32, #tpu.memory_space<vmem>>, %arg7: memref<1x32xf32, #tpu.memory_space<vmem>>, %arg8: memref<1x32xf32, #tpu.memory_space<vmem>>, %arg9: memref<32x64xbf16, #tpu.memory_space<vmem>>, %arg10: memref<1x64xf32, #tpu.memory_space<vmem>>, %arg11: memref<64x32xbf16, #tpu.memory_space<vmem>>, %arg12: memref<1x32xf32, #tpu.memory_space<vmem>>, %arg13: memref<1x32xf32, #tpu.memory_space<vmem>>, %arg14: memref<1x32xf32, #tpu.memory_space<vmem>>, %arg15: memref<2x8x32xf32, #tpu.memory_space<vmem>>) attributes {dimension_semantics = [#tpu.dimension_semantics<parallel>], iteration_bounds = array<i64: 1>, scalar_prefetch = 1 : i64, scratch_operands = 0 : i64, tpu.core_type = #tpu.core_type<tc>, window_params = [{transform_indices = @transform_0, window_bounds = array<i64: 2, 8, 32>}, {pipeline_mode = #tpu.pipeline_mode<synchronous>, transform_indices = @transform_1, window_bounds = array<i64: 32, 96>}, {pipeline_mode = #tpu.pipeline_mode<synchronous>, transform_indices = @transform_2, window_bounds = array<i64: 1, 96>}, {pipeline_mode = #tpu.pipeline_mode<synchronous>, transform_indices = @transform_3, window_bounds = array<i64: 32, 32>}, {pipeline_mode = #tpu.pipeline_mode<synchronous>, transform_indices = @transform_4, window_bounds = array<i64: 1, 32>}, {pipeline_mode = #tpu.pipeline_mode<synchronous>, transform_indices = @transform_5, window_bounds = array<i64: 1, 32>}, {pipeline_mode = #tpu.pipeline_mode<synchronous>, transform_indices = @transform_6, window_bounds = array<i64: 1, 32>}, {pipeline_mode = #tpu.pipeline_mode<synchronous>, transform_indices = @transform_7, window_bounds = array<i64: 32, 64>}, {pipeline_mode = #tpu.pipeline_mode<synchronous>, transform_indices = @transform_8, window_bounds = array<i64: 1, 64>}, {pipeline_mode = #tpu.pipeline_mode<synchronous>, transform_indices = @transform_9, window_bounds = array<i64: 64, 32>}, {pipeline_mode = #tpu.pipeline_mode<synchronous>, transform_indices = @transform_10, window_bounds = array<i64: 1, 32>}, {pipeline_mode = #tpu.pipeline_mode<synchronous>, transform_indices = @transform_11, window_bounds = array<i64: 1, 32>}, {pipeline_mode = #tpu.pipeline_mode<synchronous>, transform_indices = @transform_12, window_bounds = array<i64: 1, 32>}, {transform_indices = @transform_13, window_bounds = array<i64: 2, 8, 32>}]} {
    %c0 = arith.constant 0 : index
    %c0_0 = arith.constant 0 : index
    %c0_1 = arith.constant 0 : index
    %0 = vector.load %arg2[%c0, %c0_0, %c0_1] : memref<2x8x32xf32, #tpu.memory_space<vmem>>, vector<2x8x32xf32>
    %1 = vector.shape_cast %0 : vector<2x8x32xf32> to vector<16x32xf32>
    %2 = arith.truncf %1 : vector<16x32xf32> to vector<16x32xbf16>
    %c0_2 = arith.constant 0 : index
    %c0_3 = arith.constant 0 : index
    %3 = vector.load %arg3[%c0_2, %c0_3] : memref<32x96xbf16, #tpu.memory_space<vmem>>, vector<32x96xbf16>
    %cst = arith.constant dense<0.000000e+00> : vector<16x96xf32>
    %4 = tpu.matmul %2, %3, %cst {dimension_numbers = #tpu.dot_dimension_numbers<[1], [0], [0], [1], [0, 0, 1, 1], [], []>} : vector<16x32xbf16>, vector<32x96xbf16>, vector<16x96xf32> -> vector<16x96xf32>
    %c0_4 = arith.constant 0 : index
    %c0_5 = arith.constant 0 : index
    %5 = vector.load %arg4[%c0_4, %c0_5] : memref<1x96xf32, #tpu.memory_space<vmem>>, vector<1x96xf32>
    %6 = vector.broadcast %5 : vector<1x96xf32> to vector<16x96xf32>
    %7 = arith.addf %4, %6 : vector<16x96xf32>
    %8 = vector.extract_strided_slice %7 {offsets = [0, 0], sizes = [16, 32], strides = [1, 1]} : vector<16x96xf32> to vector<16x32xf32>
    %9 = vector.shape_cast %8 : vector<16x32xf32> to vector<2x8x32xf32>
    %10 = arith.truncf %9 : vector<2x8x32xf32> to vector<2x8x32xbf16>
    %11 = vector.extract_strided_slice %7 {offsets = [0, 32], sizes = [16, 32], strides = [1, 1]} : vector<16x96xf32> to vector<16x32xf32>
    %12 = vector.shape_cast %11 : vector<16x32xf32> to vector<2x8x32xf32>
    %13 = arith.truncf %12 : vector<2x8x32xf32> to vector<2x8x32xbf16>
    %14 = vector.extract_strided_slice %7 {offsets = [0, 64], sizes = [16, 32], strides = [1, 1]} : vector<16x96xf32> to vector<16x32xf32>
    %15 = vector.shape_cast %14 : vector<16x32xf32> to vector<2x8x32xf32>
    %16 = arith.truncf %15 : vector<2x8x32xf32> to vector<2x8x32xbf16>
    %c2_i32 = arith.constant 2 : i32
    %17 = arith.muli %arg0, %c2_i32 : i32
    %18 = tpu.iota {dimensions = array<i32: 2>} : vector<2x8x8xi32>
    %c0_i32 = arith.constant 0 : i32
    %19 = arith.addi %17, %c0_i32 : i32
    %20 = arith.index_cast %19 : i32 to index
    %21 = memref.load %arg1[%20] : memref<2xi32, #tpu.memory_space<smem>>
    %22 = vector.broadcast %21 : i32 to vector<1x8x8xi32>
    %c1_i32 = arith.constant 1 : i32
    %23 = arith.addi %17, %c1_i32 : i32
    %24 = arith.index_cast %23 : i32 to index
    %25 = memref.load %arg1[%24] : memref<2xi32, #tpu.memory_space<smem>>
    %26 = vector.broadcast %25 : i32 to vector<1x8x8xi32>
    %27 = tpu.concatenate %22, %26 in 0 : vector<1x8x8xi32>, vector<1x8x8xi32> -> vector<2x8x8xi32>
    %28 = arith.cmpi slt, %18, %27 : vector<2x8x8xi32>
    %29 = vector.extract_strided_slice %10 {offsets = [0, 0, 0], sizes = [2, 8, 16], strides = [1, 1, 1]} : vector<2x8x32xbf16> to vector<2x8x16xbf16>
    %30 = vector.extract_strided_slice %13 {offsets = [0, 0, 0], sizes = [2, 8, 16], strides = [1, 1, 1]} : vector<2x8x32xbf16> to vector<2x8x16xbf16>
    %31 = vector.extract_strided_slice %16 {offsets = [0, 0, 0], sizes = [2, 8, 16], strides = [1, 1, 1]} : vector<2x8x32xbf16> to vector<2x8x16xbf16>
    "tpu.trace_start"() <{level = 10 : i32, message = "bqd,bkd->bqk"}> : () -> ()
    %cst_6 = arith.constant dense<0.000000e+00> : vector<2x8x8xf32>
    %32 = tpu.matmul %29, %30, %cst_6 {dimension_numbers = #tpu.dot_dimension_numbers<[2], [2], [1], [1], [0, 0, 0, 1, 1, 1], [0], [0]>} : vector<2x8x16xbf16>, vector<2x8x16xbf16>, vector<2x8x8xf32> -> vector<2x8x8xf32>
    "tpu.trace_stop"() : () -> ()
    %cst_7 = arith.constant 2.500000e-01 : f32
    %33 = vector.broadcast %cst_7 : f32 to vector<2x8x8xf32>
    %34 = arith.mulf %32, %33 : vector<2x8x8xf32>
    %cst_8 = arith.constant -1.000000e+06 : f32
    %35 = vector.broadcast %cst_8 : f32 to vector<2x8x8xf32>
    %36 = arith.select %28, %34, %35 : vector<2x8x8xi1>, vector<2x8x8xf32>
    %cst_9 = arith.constant dense<0xFF800000> : vector<2x8xf32>
    %37 = vector.multi_reduction <maximumf>, %36, %cst_9 [2] : vector<2x8x8xf32> to vector<2x8xf32>
    %38 = vector.shape_cast %37 : vector<2x8xf32> to vector<2x8x1xf32>
    %39 = vector.broadcast %38 : vector<2x8x1xf32> to vector<2x8x8xf32>
    %40 = arith.subf %36, %39 : vector<2x8x8xf32>
    %41 = math.exp %40 : vector<2x8x8xf32>
    %cst_10 = arith.constant dense<0.000000e+00> : vector<2x8xf32>
    %42 = vector.multi_reduction <add>, %41, %cst_10 [2] : vector<2x8x8xf32> to vector<2x8xf32>
    %43 = vector.shape_cast %42 : vector<2x8xf32> to vector<2x8x1xf32>
    %44 = tpu.reciprocal %43 {approx = true} : vector<2x8x1xf32> -> vector<2x8x1xf32>
    %45 = vector.broadcast %44 : vector<2x8x1xf32> to vector<2x8x8xf32>
    %46 = arith.mulf %41, %45 : vector<2x8x8xf32>
    %47 = arith.truncf %46 : vector<2x8x8xf32> to vector<2x8x8xbf16>
    "tpu.trace_start"() <{level = 10 : i32, message = "bqk,bkd->bqd"}> : () -> ()
    %cst_11 = arith.constant dense<0.000000e+00> : vector<2x8x16xf32>
    %48 = tpu.matmul %47, %31, %cst_11 {dimension_numbers = #tpu.dot_dimension_numbers<[2], [1], [1], [2], [0, 0, 0, 1, 1, 2], [0], [0]>} : vector<2x8x8xbf16>, vector<2x8x16xbf16>, vector<2x8x16xf32> -> vector<2x8x16xf32>
    "tpu.trace_stop"() : () -> ()
    %49 = vector.extract_strided_slice %10 {offsets = [0, 0, 16], sizes = [2, 8, 16], strides = [1, 1, 1]} : vector<2x8x32xbf16> to vector<2x8x16xbf16>
    %50 = vector.extract_strided_slice %13 {offsets = [0, 0, 16], sizes = [2, 8, 16], strides = [1, 1, 1]} : vector<2x8x32xbf16> to vector<2x8x16xbf16>
    %51 = vector.extract_strided_slice %16 {offsets = [0, 0, 16], sizes = [2, 8, 16], strides = [1, 1, 1]} : vector<2x8x32xbf16> to vector<2x8x16xbf16>
    "tpu.trace_start"() <{level = 10 : i32, message = "bqd,bkd->bqk"}> : () -> ()
    %cst_12 = arith.constant dense<0.000000e+00> : vector<2x8x8xf32>
    %52 = tpu.matmul %49, %50, %cst_12 {dimension_numbers = #tpu.dot_dimension_numbers<[2], [2], [1], [1], [0, 0, 0, 1, 1, 1], [0], [0]>} : vector<2x8x16xbf16>, vector<2x8x16xbf16>, vector<2x8x8xf32> -> vector<2x8x8xf32>
    "tpu.trace_stop"() : () -> ()
    %cst_13 = arith.constant 2.500000e-01 : f32
    %53 = vector.broadcast %cst_13 : f32 to vector<2x8x8xf32>
    %54 = arith.mulf %52, %53 : vector<2x8x8xf32>
    %cst_14 = arith.constant -1.000000e+06 : f32
    %55 = vector.broadcast %cst_14 : f32 to vector<2x8x8xf32>
    %56 = arith.select %28, %54, %55 : vector<2x8x8xi1>, vector<2x8x8xf32>
    %cst_15 = arith.constant dense<0xFF800000> : vector<2x8xf32>
    %57 = vector.multi_reduction <maximumf>, %56, %cst_15 [2] : vector<2x8x8xf32> to vector<2x8xf32>
    %58 = vector.shape_cast %57 : vector<2x8xf32> to vector<2x8x1xf32>
    %59 = vector.broadcast %58 : vector<2x8x1xf32> to vector<2x8x8xf32>
    %60 = arith.subf %56, %59 : vector<2x8x8xf32>
    %61 = math.exp %60 : vector<2x8x8xf32>
    %cst_16 = arith.constant dense<0.000000e+00> : vector<2x8xf32>
    %62 = vector.multi_reduction <add>, %61, %cst_16 [2] : vector<2x8x8xf32> to vector<2x8xf32>
    %63 = vector.shape_cast %62 : vector<2x8xf32> to vector<2x8x1xf32>
    %64 = tpu.reciprocal %63 {approx = true} : vector<2x8x1xf32> -> vector<2x8x1xf32>
    %65 = vector.broadcast %64 : vector<2x8x1xf32> to vector<2x8x8xf32>
    %66 = arith.mulf %61, %65 : vector<2x8x8xf32>
    %67 = arith.truncf %66 : vector<2x8x8xf32> to vector<2x8x8xbf16>
    "tpu.trace_start"() <{level = 10 : i32, message = "bqk,bkd->bqd"}> : () -> ()
    %cst_17 = arith.constant dense<0.000000e+00> : vector<2x8x16xf32>
    %68 = tpu.matmul %67, %51, %cst_17 {dimension_numbers = #tpu.dot_dimension_numbers<[2], [1], [1], [2], [0, 0, 0, 1, 1, 2], [0], [0]>} : vector<2x8x8xbf16>, vector<2x8x16xbf16>, vector<2x8x16xf32> -> vector<2x8x16xf32>
    "tpu.trace_stop"() : () -> ()
    %69 = tpu.concatenate %48, %68 in 2 : vector<2x8x16xf32>, vector<2x8x16xf32> -> vector<2x8x32xf32>
    %70 = vector.shape_cast %69 : vector<2x8x32xf32> to vector<16x32xf32>
    %71 = arith.truncf %70 : vector<16x32xf32> to vector<16x32xbf16>
    %c0_18 = arith.constant 0 : index
    %c0_19 = arith.constant 0 : index
    %72 = vector.load %arg5[%c0_18, %c0_19] : memref<32x32xbf16, #tpu.memory_space<vmem>>, vector<32x32xbf16>
    %cst_20 = arith.constant dense<0.000000e+00> : vector<16x32xf32>
    %73 = tpu.matmul %71, %72, %cst_20 {dimension_numbers = #tpu.dot_dimension_numbers<[1], [0], [0], [1], [0, 0, 1, 1], [], []>} : vector<16x32xbf16>, vector<32x32xbf16>, vector<16x32xf32> -> vector<16x32xf32>
    %c0_21 = arith.constant 0 : index
    %c0_22 = arith.constant 0 : index
    %74 = vector.load %arg6[%c0_21, %c0_22] : memref<1x32xf32, #tpu.memory_space<vmem>>, vector<1x32xf32>
    %75 = vector.broadcast %74 : vector<1x32xf32> to vector<16x32xf32>
    %76 = arith.addf %73, %75 : vector<16x32xf32>
    %77 = arith.addf %1, %76 : vector<16x32xf32>
    %cst_23 = arith.constant dense<0.000000e+00> : vector<16xf32>
    %78 = vector.multi_reduction <add>, %77, %cst_23 [1] : vector<16x32xf32> to vector<16xf32>
    %79 = vector.shape_cast %78 : vector<16xf32> to vector<16x1xf32>
    %cst_24 = arith.constant 3.200000e+01 : f32
    %80 = vector.broadcast %cst_24 : f32 to vector<16x1xf32>
    %81 = arith.divf %79, %80 : vector<16x1xf32>
    %82 = vector.broadcast %81 : vector<16x1xf32> to vector<16x32xf32>
    %83 = arith.subf %77, %82 : vector<16x32xf32>
    %84 = arith.mulf %83, %83 : vector<16x32xf32>
    %cst_25 = arith.constant dense<0.000000e+00> : vector<16xf32>
    %85 = vector.multi_reduction <add>, %84, %cst_25 [1] : vector<16x32xf32> to vector<16xf32>
    %86 = vector.shape_cast %85 : vector<16xf32> to vector<16x1xf32>
    %cst_26 = arith.constant 3.200000e+01 : f32
    %87 = vector.broadcast %cst_26 : f32 to vector<16x1xf32>
    %88 = arith.divf %86, %87 : vector<16x1xf32>
    %89 = vector.broadcast %81 : vector<16x1xf32> to vector<16x32xf32>
    %90 = arith.subf %77, %89 : vector<16x32xf32>
    %cst_27 = arith.constant 9.99999974E-6 : f32
    %91 = vector.broadcast %cst_27 : f32 to vector<16x1xf32>
    %92 = arith.addf %88, %91 : vector<16x1xf32>
    %93 = math.rsqrt %92 : vector<16x1xf32>
    %94 = vector.broadcast %93 : vector<16x1xf32> to vector<16x32xf32>
    %95 = arith.mulf %90, %94 : vector<16x32xf32>
    %c0_28 = arith.constant 0 : index
    %c0_29 = arith.constant 0 : index
    %96 = vector.load %arg7[%c0_28, %c0_29] : memref<1x32xf32, #tpu.memory_space<vmem>>, vector<1x32xf32>
    %97 = vector.broadcast %96 : vector<1x32xf32> to vector<16x32xf32>
    %98 = arith.mulf %95, %97 : vector<16x32xf32>
    %c0_30 = arith.constant 0 : index
    %c0_31 = arith.constant 0 : index
    %99 = vector.load %arg8[%c0_30, %c0_31] : memref<1x32xf32, #tpu.memory_space<vmem>>, vector<1x32xf32>
    %100 = vector.broadcast %99 : vector<1x32xf32> to vector<16x32xf32>
    %101 = arith.addf %98, %100 : vector<16x32xf32>
    %102 = arith.truncf %101 : vector<16x32xf32> to vector<16x32xbf16>
    %c0_32 = arith.constant 0 : index
    %c0_33 = arith.constant 0 : index
    %103 = vector.load %arg9[%c0_32, %c0_33] : memref<32x64xbf16, #tpu.memory_space<vmem>>, vector<32x64xbf16>
    %cst_34 = arith.constant dense<0.000000e+00> : vector<16x64xf32>
    %104 = tpu.matmul %102, %103, %cst_34 {dimension_numbers = #tpu.dot_dimension_numbers<[1], [0], [0], [1], [0, 0, 1, 1], [], []>} : vector<16x32xbf16>, vector<32x64xbf16>, vector<16x64xf32> -> vector<16x64xf32>
    %c0_35 = arith.constant 0 : index
    %c0_36 = arith.constant 0 : index
    %105 = vector.load %arg10[%c0_35, %c0_36] : memref<1x64xf32, #tpu.memory_space<vmem>>, vector<1x64xf32>
    %106 = vector.broadcast %105 : vector<1x64xf32> to vector<16x64xf32>
    %107 = arith.addf %104, %106 : vector<16x64xf32>
    %cst_37 = arith.constant 0.000000e+00 : f32
    %108 = vector.broadcast %cst_37 : f32 to vector<16x64xf32>
    %109 = arith.maximumf %107, %108 : vector<16x64xf32>
    %110 = arith.truncf %109 : vector<16x64xf32> to vector<16x64xbf16>
    %c0_38 = arith.constant 0 : index
    %c0_39 = arith.constant 0 : index
    %111 = vector.load %arg11[%c0_38, %c0_39] : memref<64x32xbf16, #tpu.memory_space<vmem>>, vector<64x32xbf16>
    %cst_40 = arith.constant dense<0.000000e+00> : vector<16x32xf32>
    %112 = tpu.matmul %110, %111, %cst_40 {dimension_numbers = #tpu.dot_dimension_numbers<[1], [0], [0], [1], [0, 0, 1, 1], [], []>} : vector<16x64xbf16>, vector<64x32xbf16>, vector<16x32xf32> -> vector<16x32xf32>
    %c0_41 = arith.constant 0 : index
    %c0_42 = arith.constant 0 : index
    %113 = vector.load %arg12[%c0_41, %c0_42] : memref<1x32xf32, #tpu.memory_space<vmem>>, vector<1x32xf32>
    %114 = vector.broadcast %113 : vector<1x32xf32> to vector<16x32xf32>
    %115 = arith.addf %112, %114 : vector<16x32xf32>
    %116 = arith.addf %101, %115 : vector<16x32xf32>
    %cst_43 = arith.constant dense<0.000000e+00> : vector<16xf32>
    %117 = vector.multi_reduction <add>, %116, %cst_43 [1] : vector<16x32xf32> to vector<16xf32>
    %118 = vector.shape_cast %117 : vector<16xf32> to vector<16x1xf32>
    %cst_44 = arith.constant 3.200000e+01 : f32
    %119 = vector.broadcast %cst_44 : f32 to vector<16x1xf32>
    %120 = arith.divf %118, %119 : vector<16x1xf32>
    %121 = vector.broadcast %120 : vector<16x1xf32> to vector<16x32xf32>
    %122 = arith.subf %116, %121 : vector<16x32xf32>
    %123 = arith.mulf %122, %122 : vector<16x32xf32>
    %cst_45 = arith.constant dense<0.000000e+00> : vector<16xf32>
    %124 = vector.multi_reduction <add>, %123, %cst_45 [1] : vector<16x32xf32> to vector<16xf32>
    %125 = vector.shape_cast %124 : vector<16xf32> to vector<16x1xf32>
    %cst_46 = arith.constant 3.200000e+01 : f32
    %126 = vector.broadcast %cst_46 : f32 to vector<16x1xf32>
    %127 = arith.divf %125, %126 : vector<16x1xf32>
    %128 = vector.broadcast %120 : vector<16x1xf32> to vector<16x32xf32>
    %129 = arith.subf %116, %128 : vector<16x32xf32>
    %cst_47 = arith.constant 9.99999974E-6 : f32
    %130 = vector.broadcast %cst_47 : f32 to vector<16x1xf32>
    %131 = arith.addf %127, %130 : vector<16x1xf32>
    %132 = math.rsqrt %131 : vector<16x1xf32>
    %133 = vector.broadcast %132 : vector<16x1xf32> to vector<16x32xf32>
    %134 = arith.mulf %129, %133 : vector<16x32xf32>
    %c0_48 = arith.constant 0 : index
    %c0_49 = arith.constant 0 : index
    %135 = vector.load %arg13[%c0_48, %c0_49] : memref<1x32xf32, #tpu.memory_space<vmem>>, vector<1x32xf32>
    %136 = vector.broadcast %135 : vector<1x32xf32> to vector<16x32xf32>
    %137 = arith.mulf %134, %136 : vector<16x32xf32>
    %c0_50 = arith.constant 0 : index
    %c0_51 = arith.constant 0 : index
    %138 = vector.load %arg14[%c0_50, %c0_51] : memref<1x32xf32, #tpu.memory_space<vmem>>, vector<1x32xf32>
    %139 = vector.broadcast %138 : vector<1x32xf32> to vector<16x32xf32>
    %140 = arith.addf %137, %139 : vector<16x32xf32>
    %141 = vector.shape_cast %140 : vector<16x32xf32> to vector<2x8x32xf32>
    %c0_52 = arith.constant 0 : index
    %c0_53 = arith.constant 0 : index
    %c0_54 = arith.constant 0 : index
    %142 = vector.load %arg15[%c0_52, %c0_53, %c0_54] : memref<2x8x32xf32, #tpu.memory_space<vmem>>, vector<2x8x32xf32>
    tpu.vector_store %arg15[%c0_52, %c0_53, %c0_54], %141 {strides = array<i32>} : memref<2x8x32xf32, #tpu.memory_space<vmem>>, vector<2x8x32xf32>,
    return
  }
  func.func @transform_0(%arg0: i32, %arg1: memref<2xi32, #tpu.memory_space<smem>>) -> (i32, i32, i32) {
    %c0_i32 = arith.constant 0 : i32
    %c0_i32_0 = arith.constant 0 : i32
    %c0_i32_1 = arith.constant 0 : i32
    return %arg0, %c0_i32, %c0_i32_0 : i32, i32, i32
  }
  func.func @transform_1(%arg0: i32, %arg1: memref<2xi32, #tpu.memory_space<smem>>) -> (i32, i32) {
    %c0_i32 = arith.constant 0 : i32
    %c0_i32_0 = arith.constant 0 : i32
    %c0_i32_1 = arith.constant 0 : i32
    return %c0_i32, %c0_i32_0 : i32, i32
  }
  func.func @transform_2(%arg0: i32, %arg1: memref<2xi32, #tpu.memory_space<smem>>) -> (i32, i32) {
    %c0_i32 = arith.constant 0 : i32
    %c0_i32_0 = arith.constant 0 : i32
    %c0_i32_1 = arith.constant 0 : i32
    return %c0_i32, %c0_i32_0 : i32, i32
  }
  func.func @transform_3(%arg0: i32, %arg1: memref<2xi32, #tpu.memory_space<smem>>) -> (i32, i32) {
    %c0_i32 = arith.constant 0 : i32
    %c0_i32_0 = arith.constant 0 : i32
    %c0_i32_1 = arith.constant 0 : i32
    return %c0_i32, %c0_i32_0 : i32, i32
  }
  func.func @transform_4(%arg0: i32, %arg1: memref<2xi32, #tpu.memory_space<smem>>) -> (i32, i32) {
    %c0_i32 = arith.constant 0 : i32
    %c0_i32_0 = arith.constant 0 : i32
    %c0_i32_1 = arith.constant 0 : i32
    return %c0_i32, %c0_i32_0 : i32, i32
  }
  func.func @transform_5(%arg0: i32, %arg1: memref<2xi32, #tpu.memory_space<smem>>) -> (i32, i32) {
    %c0_i32 = arith.constant 0 : i32
    %c0_i32_0 = arith.constant 0 : i32
    %c0_i32_1 = arith.constant 0 : i32
    return %c0_i32, %c0_i32_0 : i32, i32
  }
  func.func @transform_6(%arg0: i32, %arg1: memref<2xi32, #tpu.memory_space<smem>>) -> (i32, i32) {
    %c0_i32 = arith.constant 0 : i32
    %c0_i32_0 = arith.constant 0 : i32
    %c0_i32_1 = arith.constant 0 : i32
    return %c0_i32, %c0_i32_0 : i32, i32
  }
  func.func @transform_7(%arg0: i32, %arg1: memref<2xi32, #tpu.memory_space<smem>>) -> (i32, i32) {
    %c0_i32 = arith.constant 0 : i32
    %c0_i32_0 = arith.constant 0 : i32
    %c0_i32_1 = arith.constant 0 : i32
    return %c0_i32, %c0_i32_0 : i32, i32
  }
  func.func @transform_8(%arg0: i32, %arg1: memref<2xi32, #tpu.memory_space<smem>>) -> (i32, i32) {
    %c0_i32 = arith.constant 0 : i32
    %c0_i32_0 = arith.constant 0 : i32
    %c0_i32_1 = arith.constant 0 : i32
    return %c0_i32, %c0_i32_0 : i32, i32
  }
  func.func @transform_9(%arg0: i32, %arg1: memref<2xi32, #tpu.memory_space<smem>>) -> (i32, i32) {
    %c0_i32 = arith.constant 0 : i32
    %c0_i32_0 = arith.constant 0 : i32
    %c0_i32_1 = arith.constant 0 : i32
    return %c0_i32, %c0_i32_0 : i32, i32
  }
  func.func @transform_10(%arg0: i32, %arg1: memref<2xi32, #tpu.memory_space<smem>>) -> (i32, i32) {
    %c0_i32 = arith.constant 0 : i32
    %c0_i32_0 = arith.constant 0 : i32
    %c0_i32_1 = arith.constant 0 : i32
    return %c0_i32, %c0_i32_0 : i32, i32
  }
  func.func @transform_11(%arg0: i32, %arg1: memref<2xi32, #tpu.memory_space<smem>>) -> (i32, i32) {
    %c0_i32 = arith.constant 0 : i32
    %c0_i32_0 = arith.constant 0 : i32
    %c0_i32_1 = arith.constant 0 : i32
    return %c0_i32, %c0_i32_0 : i32, i32
  }
  func.func @transform_12(%arg0: i32, %arg1: memref<2xi32, #tpu.memory_space<smem>>) -> (i32, i32) {
    %c0_i32 = arith.constant 0 : i32
    %c0_i32_0 = arith.constant 0 : i32
    %c0_i32_1 = arith.constant 0 : i32
    return %c0_i32, %c0_i32_0 : i32, i32
  }
  func.func @transform_13(%arg0: i32, %arg1: memref<2xi32, #tpu.memory_space<smem>>) -> (i32, i32, i32) {
    %c0_i32 = arith.constant 0 : i32
    %c0_i32_0 = arith.constant 0 : i32
    %c0_i32_1 = arith.constant 0 : i32
    return %arg0, %c0_i32, %c0_i32_0 : i32, i32, i32
  }
}

</mosaic_0001>

<llo_original>
// kernel: tpu_custom_call.1
$region0: #{tpu_custom_call.1}
  #allocation0 [shape = 'u32[]', space=smem, size = 0x4, offset = 0x4, fixed_abs, tag = 'smem constant byte address 0x4 - core index']
  #allocation1 [shape = 'u32[72,128]{1,0:T(1,128)}', space=vmem, size = 0x9000, scoped, tag = 'internal scratch']
  #allocation2 [shape = 's32[1]{0}', space=sflag, size = 0x4, scoped, tag = 'scoped memory for tpu_custom_call.1']
  #allocation3 [shape = 'u8[512]{0}', space=smem, size = 0x200, scoped, tag = 'prefetched SMEM operand 0']
  %s0 = inlined_call_operand.hbm [shape: s32[2], index: 0, kind: input, shape index: {}]
  %s1 = inlined_call_operand.vmem [shape: f32[2,8,32], index: 1, kind: input, shape index: {}]
  %s2 = inlined_call_operand.vmem [shape: bf16[32,96], index: 2, kind: input, shape index: {}]
  %s3 = inlined_call_operand.vmem [shape: f32[1,96], index: 3, kind: input, shape index: {}]
  %s4 = inlined_call_operand.vmem [shape: bf16[32,32], index: 4, kind: input, shape index: {}]
  %s5 = inlined_call_operand.vmem [shape: f32[1,32], index: 5, kind: input, shape index: {}]
  %s6 = inlined_call_operand.vmem [shape: f32[1,32], index: 6, kind: input, shape index: {}]
  %s7 = inlined_call_operand.vmem [shape: f32[1,32], index: 7, kind: input, shape index: {}]
  %s8 = inlined_call_operand.hbm [shape: bf16[32,64], index: 8, kind: input, shape index: {}]
  %s9 = inlined_call_operand.vmem [shape: f32[1,64], index: 9, kind: input, shape index: {}]
  %s10 = inlined_call_operand.vmem [shape: bf16[64,32], index: 10, kind: input, shape index: {}]
  %s11 = inlined_call_operand.vmem [shape: f32[1,32], index: 11, kind: input, shape index: {}]
  %s12 = inlined_call_operand.vmem [shape: f32[1,32], index: 12, kind: input, shape index: {}]
  %s13 = inlined_call_operand.vmem [shape: f32[1,32], index: 13, kind: input, shape index: {}]
  %s14 = inlined_call_operand.hbm [shape: f32[2,8,32], index: 14, kind: output, shape index: {}]
  %s15 = sld [smem:[#allocation0]]
  $region66: #{tpu_custom_call.1} parent=0
    _
  %s17 = ssub.s32 1, %s15
  %s18 = scalar_select 0, %s17, %s15
  %s20 = sshll.u32 %s0, 4
  %s21 = int_to_ptr.hbm [resolvable:$true] %s20
  %23 = dma.hbm_to_smem %s21, 16, [#allocation3], [#allocation2]
  %25 = dma.done [#allocation2], 16
  %26 = sfence
  $region1: #{tpu_custom_call.1} parent=0
    #allocation4 [shape = 'u8[8192]{0}', space=vmem, size = 0x2000, scoped, tag = 'input window, operand 8, single buffered']
    #allocation5 [shape = 's32[1]{0}', space=sflag, size = 0x4, scoped, tag = 'scoped memory for tpu_custom_call.1']
    #allocation6 [shape = 's32[1]{0}', space=sflag, size = 0x4, scoped, tag = 'scoped memory for tpu_custom_call.1']
    #allocation7 [shape = 'u8[8192]{0}', space=vmem, size = 0x2000, scoped, tag = 'output window, operand 0, single buffered']
    %27 = vsyncpa [#allocation5], 0
    %28 = vsyncpa [#allocation6], 0
    // Predicated region
    $region2: #{tpu_custom_call.1} parent=1 // pred_check
      _
    $region3: #{tpu_custom_call.1} parent=1 // pred_check_branch
      %30 = sbr.rel (0) target = $region5
    $region4: #{tpu_custom_call.1} parent=1 // pred_region
      _
    $region5: #{tpu_custom_call.1} parent=1 // pred_fallthru
      _
    // Predicated region
    $region6: #{tpu_custom_call.1} parent=1 // pred_check
      _
    $region7: #{tpu_custom_call.1} parent=1 // pred_check_branch
      %32 = sbr.rel (0) target = $region9
    $region8: #{tpu_custom_call.1} parent=1 // pred_region
      _
    $region9: #{tpu_custom_call.1} parent=1 // pred_fallthru
      _
    // Predicated region
    $region10: #{tpu_custom_call.1} parent=1 // pred_check
      _
    $region11: #{tpu_custom_call.1} parent=1 // pred_check_branch
      %34 = sbr.rel (0) target = $region13
    $region12: #{tpu_custom_call.1} parent=1 // pred_region
      _
    $region13: #{tpu_custom_call.1} parent=1 // pred_fallthru
      _
    // Predicated region
    $region14: #{tpu_custom_call.1} parent=1 // pred_check
      _
    $region15: #{tpu_custom_call.1} parent=1 // pred_check_branch
      %36 = sbr.rel (0) target = $region17
    $region16: #{tpu_custom_call.1} parent=1 // pred_region
      _
    $region17: #{tpu_custom_call.1} parent=1 // pred_fallthru
      _
    // Predicated region
    $region18: #{tpu_custom_call.1} parent=1 // pred_check
      _
    $region19: #{tpu_custom_call.1} parent=1 // pred_check_branch
      %38 = sbr.rel (0) target = $region21
    $region20: #{tpu_custom_call.1} parent=1 // pred_region
      _
    $region21: #{tpu_custom_call.1} parent=1 // pred_fallthru
      _
    // Predicated region
    $region22: #{tpu_custom_call.1} parent=1 // pred_check
      _
    $region23: #{tpu_custom_call.1} parent=1 // pred_check_branch
      %40 = sbr.rel (0) target = $region25
    $region24: #{tpu_custom_call.1} parent=1 // pred_region
      _
    $region25: #{tpu_custom_call.1} parent=1 // pred_fallthru
      _
    // Predicated region
    $region26: #{tpu_custom_call.1} parent=1 // pred_check
      _
    $region27: #{tpu_custom_call.1} parent=1 // pred_check_branch
      %42 = sbr.rel (0) target = $region29
    $region28: #{tpu_custom_call.1} parent=1 // pred_region
      _
    $region29: #{tpu_custom_call.1} parent=1 // pred_fallthru
      _
    // Predicated region
    $region30: #{tpu_custom_call.1} parent=1 // pred_check
      _
    $region31: #{tpu_custom_call.1} parent=1 // pred_check_branch
      %44 = sbr.rel (0) target = $region33
    $region32: #{tpu_custom_call.1} parent=1 // pred_region
      %46 = vsyncadd [#allocation5], 0
      %s47 = sshll.u32 %s8, 4
      %s48 = int_to_ptr.hbm [resolvable:$true] %s47
      %s49 = sshll.u32 [#allocation4], 4
      %s50 = int_to_ptr.vmem [resolvable:$true] %s49
      %55 = dma.hbm_to_vmem [thread:$0]  %s48, 256, %s50, [#allocation5], 64, 64, 4
    $region33: #{tpu_custom_call.1} parent=1 // pred_fallthru
      _
    // Predicated region
    $region34: #{tpu_custom_call.1} parent=1 // pred_check
      _
    $region35: #{tpu_custom_call.1} parent=1 // pred_check_branch
      %57 = sbr.rel (0) target = $region37
    $region36: #{tpu_custom_call.1} parent=1 // pred_region
      _
    $region37: #{tpu_custom_call.1} parent=1 // pred_fallthru
      _
    // Predicated region
    $region38: #{tpu_custom_call.1} parent=1 // pred_check
      _
    $region39: #{tpu_custom_call.1} parent=1 // pred_check_branch
      %59 = sbr.rel (0) target = $region41
    $region40: #{tpu_custom_call.1} parent=1 // pred_region
      _
    $region41: #{tpu_custom_call.1} parent=1 // pred_fallthru
      _
    // Predicated region
    $region42: #{tpu_custom_call.1} parent=1 // pred_check
      _
    $region43: #{tpu_custom_call.1} parent=1 // pred_check_branch
      %61 = sbr.rel (0) target = $region45
    $region44: #{tpu_custom_call.1} parent=1 // pred_region
      _
    $region45: #{tpu_custom_call.1} parent=1 // pred_fallthru
      _
    // Predicated region
    $region46: #{tpu_custom_call.1} parent=1 // pred_check
      _
    $region47: #{tpu_custom_call.1} parent=1 // pred_check_branch
      %63 = sbr.rel (0) target = $region49
    $region48: #{tpu_custom_call.1} parent=1 // pred_region
      _
    $region49: #{tpu_custom_call.1} parent=1 // pred_fallthru
      _
    // Predicated region
    $region50: #{tpu_custom_call.1} parent=1 // pred_check
      _
    $region51: #{tpu_custom_call.1} parent=1 // pred_check_branch
      %65 = sbr.rel (0) target = $region53
    $region52: #{tpu_custom_call.1} parent=1 // pred_region
      _
    $region53: #{tpu_custom_call.1} parent=1 // pred_fallthru
      _
    // Predicated region
    $region54: #{tpu_custom_call.1} parent=1 // pred_check
      _
    $region55: #{tpu_custom_call.1} parent=1 // pred_check_branch
      %67 = sbr.rel (0) target = $region57
    $region56: #{tpu_custom_call.1} parent=1 // pred_region
      %69 = dma.done [#allocation5], 256
    $region57: #{tpu_custom_call.1} parent=1 // pred_fallthru
      _
    %v71 = vld [vmem:[%s1] sm:$0xff]
    %v72 = vld [vmem:[%s1 + $0x8] sm:$0xff]
    %v73 = vpack.c.bf16 %v72, %v71
    %v74 = vld [vmem:[%s2] sm:$0xf]
    %v75 = vld [vmem:[%s2 + $0x4] sm:$0xf]
    %v76 = vld [vmem:[%s2 + $0x8] sm:$0xf]
    %v77 = vld [vmem:[%s2 + $0xc] sm:$0xf]
    %v78 = vld [vmem:[%s3] sm:$0x1]
    %v80 = vperm.slane %v78, 0
    %v86 = vunpack.c.l.b16 %v74
    %v87 = vunpack.c.l.b16 %v75
    %v88 = vunpack.c.l.b16 %v76
    %v89 = vunpack.c.l.b16 %v77
    %v90 = vpack.c.b16 %v87, %v86
    %v91 = vpack.c.b16 %v89, %v88
    %vm94 = vcmask 261120
    %v96 = vsel %vm94, %v73, 0
    %98 = vmatpush.bf16.msra.mxu0 0
    %99 = vmatpush.bf16.msra.mxu0 0
    %100 = vmatpush.bf16.msra.mxu0 0
    %101 = vmatpush.bf16.msra.mxu0 0
    %102 = vmatpush.bf16.msra.mxu0 0
    %103 = vmatpush.bf16.msra.mxu0 0
    %104 = vmatpush.bf16.msra.mxu0 %v91
    %105 = vmatpush.bf16.msra.mxu0 %v90
    %106 = vmatmul.bf16.gmra.mxu0 %v96
    %v107 = vpop.f32.mrf.mxu0
    %v108 = vadd.f32 %v80, %v107
    %v109 = vpop.f32.mrf.mxu0
    %v110 = vadd.f32 %v80, %v109
    %111 = vdwg.mxu0
    %v112 = vpack.c.bf16 %v108, %v108
    %v113 = vpack.c.bf16 %v110, %v110
    %s114 = smul.u32 0, 2
    %v115 = vlaneseq
    %v116 = vand.u32 %v115, 127
    %s117 = sld [smem:[#allocation3 + %s114]]
    %v118 = vstv %s117
    %s119 = sadd.s32 %s114, 1
    %s120 = sld [smem:[#allocation3 + %s119]]
    %v121 = vstv %s120
    %vm122 = vcmp.lt.s32.totalorder %v116, %v118
    %vm123 = vcmp.lt.s32.totalorder %v116, %v121
    %v125 = vunpack.c.l.b16 %v112
    %v126 = vpack.c.b16 %v125, %v125
    %127 = vrot.lane.b32.xlu0 %v126, 96
    %v128 = vpop.permute.xlu0 %127
    %vm129 = vcmask 130048
    %v131 = vsel %vm129, %v112, 0
    %v134 = vsel %vm129, %v128, 0
    %136 = vmatpush.bf16.xpose.msra.mxu0 0
    %137 = vmatpush.bf16.xpose.msra.mxu0 0
    %138 = vmatpush.bf16.xpose.msra.mxu0 0
    %139 = vmatpush.bf16.xpose.msra.mxu0 0
    %140 = vmatpush.bf16.xpose.msra.mxu0 0
    %141 = vmatpush.bf16.xpose.msra.mxu0 0
    %142 = vmatpush.bf16.xpose.msra.mxu0 0
    %143 = vmatpush.bf16.xpose.msra.mxu0 %v134
    %144 = vmatmul.bf16.gmra.mxu0 %v131
    %v145 = vpop.f32.mrf.mxu0
    %v146 = vadd.f32 0.0, %v145
    %v147 = vpop.f32.mrf.mxu0
    %148 = vdwg.mxu0
    %v150 = vunpack.c.l.b16 %v113
    %v151 = vpack.c.b16 %v150, %v150
    %152 = vrot.lane.b32.xlu0 %v151, 96
    %v153 = vpop.permute.xlu0 %152
    %v155 = vsel %vm129, %v113, 0
    %v158 = vsel %vm129, %v153, 0
    %160 = vmatpush.bf16.xpose.msra.mxu0 0
    %161 = vmatpush.bf16.xpose.msra.mxu0 0
    %162 = vmatpush.bf16.xpose.msra.mxu0 0
    %163 = vmatpush.bf16.xpose.msra.mxu0 0
    %164 = vmatpush.bf16.xpose.msra.mxu0 0
    %165 = vmatpush.bf16.xpose.msra.mxu0 0
    %166 = vmatpush.bf16.xpose.msra.mxu0 0
    %167 = vmatpush.bf16.xpose.msra.mxu0 %v158
    %168 = vmatmul.bf16.gmra.mxu0 %v155
    %v169 = vpop.f32.mrf.mxu0
    %v170 = vadd.f32 0.0, %v169
    %v171 = vpop.f32.mrf.mxu0
    %172 = vdwg.mxu0
    %v173 = vmul.f32 %v146, 0.25
    %v174 = vmul.f32 %v170, 0.25
    %v175 = vsel %vm122, %v173, -1000000.0
    %v176 = vsel %vm123, %v174, -1000000.0
    %vm177 = vcmask 64512
    %v178 = vsel %vm177, %v175, -inf
    %179 = vmax.xlane.f32.xlu0 %v178
    %v180 = vpop.xlane.xlu0 %179
    %v181 = vsel %vm177, %v176, -inf
    %182 = vmax.xlane.f32.xlu0 %v181
    %v183 = vpop.xlane.xlu0 %182
    %v184 = vsub.f32 %v175, %v180
    %v185 = vsub.f32 %v176, %v183
    %v186 = vmul.f32 %v184, 1.442695
    %v187 = vpow.pop %v186
    %v188 = vmul.f32 %v185, 1.442695
    %v189 = vpow.pop %v188
    %v190 = vsel %vm177, %v187, 0.0
    %191 = vadd.xlane.f32.xlu0 %v190
    %v192 = vpop.xlane.xlu0 %191
    %v193 = vsel %vm177, %v189, 0.0
    %194 = vadd.xlane.f32.xlu0 %v193
    %v195 = vpop.xlane.xlu0 %194
    %v196 = vrcp.pop %v192
    %v197 = vrcp.pop %v195
    %v198 = vmul.f32 %v187, %v196
    %v199 = vmul.f32 %v189, %v197
    %v200 = vpack.c.bf16 %v198, %v198
    %v201 = vpack.c.bf16 %v199, %v199
    %202 = vrot.lane.b32.xlu0 %v126, 64
    %v203 = vpop.permute.xlu0 %202
    %v205 = vsel %vm177, %v200, 0
    %vm207 = vcmask 1043456
    %v209 = vsel %vm207, %v203, 0
    %211 = vmatpush.bf16.msra.mxu0 0
    %212 = vmatpush.bf16.msra.mxu0 0
    %213 = vmatpush.bf16.msra.mxu0 0
    %214 = vmatpush.bf16.msra.mxu0 0
    %215 = vmatpush.bf16.msra.mxu0 0
    %216 = vmatpush.bf16.msra.mxu0 0
    %217 = vmatpush.bf16.msra.mxu0 0
    %218 = vmatpush.bf16.msra.mxu0 %v209
    %219 = vmatmul.bf16.gmra.mxu0 %v205
    %v220 = vpop.f32.mrf.mxu0
    %v221 = vadd.f32 0.0, %v220
    %v222 = vpop.f32.mrf.mxu0
    %223 = vdwg.mxu0
    %224 = vrot.lane.b32.xlu0 %v151, 64
    %v225 = vpop.permute.xlu0 %224
    %v227 = vsel %vm177, %v201, 0
    %v230 = vsel %vm207, %v225, 0
    %232 = vmatpush.bf16.msra.mxu0 0
    %233 = vmatpush.bf16.msra.mxu0 0
    %234 = vmatpush.bf16.msra.mxu0 0
    %235 = vmatpush.bf16.msra.mxu0 0
    %236 = vmatpush.bf16.msra.mxu0 0
    %237 = vmatpush.bf16.msra.mxu0 0
    %238 = vmatpush.bf16.msra.mxu0 0
    %239 = vmatpush.bf16.msra.mxu0 %v230
    %240 = vmatmul.bf16.gmra.mxu0 %v227
    %v241 = vpop.f32.mrf.mxu0
    %v242 = vadd.f32 0.0, %v241
    %v243 = vpop.f32.mrf.mxu0
    %244 = vdwg.mxu0
    %245 = vrot.lane.b32.xlu0 %v126, 112
    %v246 = vpop.permute.xlu0 %245
    %247 = vrot.lane.b32.xlu0 %v126, 80
    %v248 = vpop.permute.xlu0 %247
    %v250 = vsel %vm129, %v246, 0
    %v253 = vsel %vm129, %v248, 0
    %255 = vmatpush.bf16.xpose.msra.mxu0 0
    %256 = vmatpush.bf16.xpose.msra.mxu0 0
    %257 = vmatpush.bf16.xpose.msra.mxu0 0
    %258 = vmatpush.bf16.xpose.msra.mxu0 0
    %259 = vmatpush.bf16.xpose.msra.mxu0 0
    %260 = vmatpush.bf16.xpose.msra.mxu0 0
    %261 = vmatpush.bf16.xpose.msra.mxu0 0
    %262 = vmatpush.bf16.xpose.msra.mxu0 %v253
    %263 = vmatmul.bf16.gmra.mxu0 %v250
    %v264 = vpop.f32.mrf.mxu0
    %v265 = vadd.f32 0.0, %v264
    %v266 = vpop.f32.mrf.mxu0
    %267 = vdwg.mxu0
    %268 = vrot.lane.b32.xlu0 %v151, 112
    %v269 = vpop.permute.xlu0 %268
    %270 = vrot.lane.b32.xlu0 %v151, 80
    %v271 = vpop.permute.xlu0 %270
    %v273 = vsel %vm129, %v269, 0
    %v276 = vsel %vm129, %v271, 0
    %278 = vmatpush.bf16.xpose.msra.mxu0 0
    %279 = vmatpush.bf16.xpose.msra.mxu0 0
    %280 = vmatpush.bf16.xpose.msra.mxu0 0
    %281 = vmatpush.bf16.xpose.msra.mxu0 0
    %282 = vmatpush.bf16.xpose.msra.mxu0 0
    %283 = vmatpush.bf16.xpose.msra.mxu0 0
    %284 = vmatpush.bf16.xpose.msra.mxu0 0
    %285 = vmatpush.bf16.xpose.msra.mxu0 %v276
    %286 = vmatmul.bf16.gmra.mxu0 %v273
    %v287 = vpop.f32.mrf.mxu0
    %v288 = vadd.f32 0.0, %v287
    %v289 = vpop.f32.mrf.mxu0
    %290 = vdwg.mxu0
    %v291 = vmul.f32 %v265, 0.25
    %v292 = vmul.f32 %v288, 0.25
    %v293 = vsel %vm122, %v291, -1000000.0
    %v294 = vsel %vm123, %v292, -1000000.0
    %v295 = vsel %vm177, %v293, -inf
    %296 = vmax.xlane.f32.xlu0 %v295
    %v297 = vpop.xlane.xlu0 %296
    %v298 = vsel %vm177, %v294, -inf
    %299 = vmax.xlane.f32.xlu0 %v298
    %v300 = vpop.xlane.xlu0 %299
    %v301 = vsub.f32 %v293, %v297
    %v302 = vsub.f32 %v294, %v300
    %v303 = vmul.f32 %v301, 1.442695
    %v304 = vpow.pop %v303
    %v305 = vmul.f32 %v302, 1.442695
    %v306 = vpow.pop %v305
    %v307 = vsel %vm177, %v304, 0.0
    %308 = vadd.xlane.f32.xlu0 %v307
    %v309 = vpop.xlane.xlu0 %308
    %v310 = vsel %vm177, %v306, 0.0
    %311 = vadd.xlane.f32.xlu0 %v310
    %v312 = vpop.xlane.xlu0 %311
    %v313 = vrcp.pop %v309
    %v314 = vrcp.pop %v312
    %v315 = vmul.f32 %v304, %v313
    %v316 = vmul.f32 %v306, %v314
    %v317 = vpack.c.bf16 %v315, %v315
    %v318 = vpack.c.bf16 %v316, %v316
    %319 = vrot.lane.b32.xlu0 %v126, 48
    %v320 = vpop.permute.xlu0 %319
    %v322 = vsel %vm177, %v317, 0
    %v325 = vsel %vm207, %v320, 0
    %327 = vmatpush.bf16.msra.mxu0 0
    %328 = vmatpush.bf16.msra.mxu0 0
    %329 = vmatpush.bf16.msra.mxu0 0
    %330 = vmatpush.bf16.msra.mxu0 0
    %331 = vmatpush.bf16.msra.mxu0 0
    %332 = vmatpush.bf16.msra.mxu0 0
    %333 = vmatpush.bf16.msra.mxu0 0
    %334 = vmatpush.bf16.msra.mxu0 %v325
    %335 = vmatmul.bf16.gmra.mxu0 %v322
    %v336 = vpop.f32.mrf.mxu0
    %v337 = vadd.f32 0.0, %v336
    %v338 = vpop.f32.mrf.mxu0
    %339 = vdwg.mxu0
    %340 = vrot.lane.b32.xlu0 %v151, 48
    %v341 = vpop.permute.xlu0 %340
    %v343 = vsel %vm177, %v318, 0
    %v346 = vsel %vm207, %v341, 0
    %348 = vmatpush.bf16.msra.mxu0 0
    %349 = vmatpush.bf16.msra.mxu0 0
    %350 = vmatpush.bf16.msra.mxu0 0
    %351 = vmatpush.bf16.msra.mxu0 0
    %352 = vmatpush.bf16.msra.mxu0 0
    %353 = vmatpush.bf16.msra.mxu0 0
    %354 = vmatpush.bf16.msra.mxu0 0
    %355 = vmatpush.bf16.msra.mxu0 %v346
    %356 = vmatmul.bf16.gmra.mxu0 %v343
    %v357 = vpop.f32.mrf.mxu0
    %v358 = vadd.f32 0.0, %v357
    %v359 = vpop.f32.mrf.mxu0
    %360 = vdwg.mxu0
    %363 = vrot.lane.b32.xlu0 %v337, 16
    %v364 = vpop.permute.xlu0 %363
    %365 = vrot.lane.b32.xlu0 %v358, 16
    %v366 = vpop.permute.xlu0 %365
    %v369 = vsel %vm129, %v221, %v364
    %v370 = vsel %vm129, %v242, %v366
    %v371 = vpack.c.bf16 %v370, %v369
    %v372 = vld [vmem:[%s4] sm:$0xf]
    %v373 = vld [vmem:[%s4 + $0x4] sm:$0xf]
    %v374 = vld [vmem:[%s4 + $0x8] sm:$0xf]
    %v375 = vld [vmem:[%s4 + $0xc] sm:$0xf]
    %v376 = vld [vmem:[%s5] sm:$0x1]
    %v378 = vperm.slane %v376, 0
    %v384 = vunpack.c.l.b16 %v372
    %v385 = vunpack.c.l.b16 %v373
    %v386 = vunpack.c.l.b16 %v374
    %v387 = vunpack.c.l.b16 %v375
    %v388 = vpack.c.b16 %v385, %v384
    %v389 = vpack.c.b16 %v387, %v386
    %v393 = vsel %vm94, %v371, 0
    %395 = vmatpush.bf16.msra.mxu0 0
    %396 = vmatpush.bf16.msra.mxu0 0
    %397 = vmatpush.bf16.msra.mxu0 0
    %398 = vmatpush.bf16.msra.mxu0 0
    %399 = vmatpush.bf16.msra.mxu0 0
    %400 = vmatpush.bf16.msra.mxu0 0
    %401 = vmatpush.bf16.msra.mxu0 %v389
    %402 = vmatpush.bf16.msra.mxu0 %v388
    %403 = vmatmul.bf16.gmra.mxu0 %v393
    %v404 = vpop.f32.mrf.mxu0
    %v405 = vadd.f32 %v378, %v404
    %v406 = vpop.f32.mrf.mxu0
    %v407 = vadd.f32 %v378, %v406
    %408 = vdwg.mxu0
    %v409 = vadd.f32 %v71, %v405
    %v410 = vadd.f32 %v72, %v407
    %v411 = vsel %vm94, %v409, 0.0
    %412 = vadd.xlane.f32.xlu0 %v411
    %v413 = vpop.xlane.xlu0 %412
    %v414 = vsel %vm94, %v410, 0.0
    %415 = vadd.xlane.f32.xlu0 %v414
    %v416 = vpop.xlane.xlu0 %415
    %v417 = vrcp.pop 32.0
    %v418 = vmul.f32 32.0, %v417
    %v419 = vsub.f32 1.0, %v418
    %v420 = vmul.f32 %v417, %v419
    %v421 = vadd.f32 %v417, %v420
    %vm422 = vweird.f32 %v417
    %v423 = vsel %vm422, %v417, %v421
    %v424 = vmul.f32 %v413, %v423
    %v425 = vmul.f32 %v416, %v423
    %v426 = vsub.f32 %v409, %v424
    %v427 = vsub.f32 %v410, %v425
    %v428 = vmul.f32 %v426, %v426
    %v429 = vmul.f32 %v427, %v427
    %v430 = vsel %vm94, %v428, 0.0
    %431 = vadd.xlane.f32.xlu0 %v430
    %v432 = vpop.xlane.xlu0 %431
    %v433 = vsel %vm94, %v429, 0.0
    %434 = vadd.xlane.f32.xlu0 %v433
    %v435 = vpop.xlane.xlu0 %434
    %v436 = vmul.f32 %v432, %v423
    %v437 = vmul.f32 %v435, %v423
    %v438 = vadd.f32 %v436, 1e-05
    %v439 = vadd.f32 %v437, 1e-05
    %v440 = vrsqrt.pop %v438
    %v441 = vmul.f32 %v440, %v438
    %v442 = vmul.f32 %v441, %v440
    %v443 = vmul.f32 0.5, %v442
    %v444 = vsub.f32 1.5, %v443
    %v445 = vmul.f32 %v440, %v444
    %vm446 = vweird.f32 %v438
    %vm447 = vweird.f32 %v440
    %vm448 = vmor %vm446, %vm447
    %v449 = vsel %vm448, %v440, %v445
    %v450 = vrsqrt.pop %v439
    %v451 = vmul.f32 %v450, %v439
    %v452 = vmul.f32 %v451, %v450
    %v453 = vmul.f32 0.5, %v452
    %v454 = vsub.f32 1.5, %v453
    %v455 = vmul.f32 %v450, %v454
    %vm456 = vweird.f32 %v439
    %vm457 = vweird.f32 %v450
    %vm458 = vmor %vm456, %vm457
    %v459 = vsel %vm458, %v450, %v455
    %v460 = vmul.f32 %v426, %v449
    %v461 = vmul.f32 %v427, %v459
    %v462 = vld [vmem:[%s6] sm:$0x1]
    %v464 = vperm.slane %v462, 0
    %v466 = vmul.f32 %v460, %v464
    %v467 = vmul.f32 %v461, %v464
    %v468 = vld [vmem:[%s7] sm:$0x1]
    %v470 = vperm.slane %v468, 0
    %v472 = vadd.f32 %v466, %v470
    %v473 = vadd.f32 %v467, %v470
    %v474 = vpack.c.bf16 %v473, %v472
    %v475 = vld [vmem:[#allocation4] sm:$0xf]
    %v476 = vld [vmem:[#allocation4 + $0x4] sm:$0xf]
    %v477 = vld [vmem:[#allocation4 + $0x8] sm:$0xf]
    %v478 = vld [vmem:[#allocation4 + $0xc] sm:$0xf]
    %v479 = vld [vmem:[%s9] sm:$0x1]
    %v481 = vperm.slane %v479, 0
    %v487 = vunpack.c.l.b16 %v475
    %v488 = vunpack.c.l.b16 %v476
    %v489 = vunpack.c.l.b16 %v477
    %v490 = vunpack.c.l.b16 %v478
    %v491 = vpack.c.b16 %v488, %v487
    %v492 = vpack.c.b16 %v490, %v489
    %v496 = vsel %vm94, %v474, 0
    %498 = vmatpush.bf16.msra.mxu0 0
    %499 = vmatpush.bf16.msra.mxu0 0
    %500 = vmatpush.bf16.msra.mxu0 0
    %501 = vmatpush.bf16.msra.mxu0 0
    %502 = vmatpush.bf16.msra.mxu0 0
    %503 = vmatpush.bf16.msra.mxu0 0
    %504 = vmatpush.bf16.msra.mxu0 %v492
    %505 = vmatpush.bf16.msra.mxu0 %v491
    %506 = vmatmul.bf16.gmra.mxu0 %v496
    %v507 = vpop.f32.mrf.mxu0
    %v508 = vadd.f32 %v481, %v507
    %v509 = vpop.f32.mrf.mxu0
    %v510 = vadd.f32 %v481, %v509
    %511 = vdwg.mxu0
    %v512 = vmax.f32 %v508, 0.0
    %v513 = vmax.f32 %v510, 0.0
    %v514 = vpack.c.bf16 %v513, %v512
    %v515 = vld [vmem:[%s10] sm:$0xf]
    %v516 = vld [vmem:[%s10 + $0x4] sm:$0xf]
    %v517 = vld [vmem:[%s10 + $0x8] sm:$0xf]
    %v518 = vld [vmem:[%s10 + $0xc] sm:$0xf]
    %v519 = vld [vmem:[%s10 + $0x10] sm:$0xf]
    %v520 = vld [vmem:[%s10 + $0x14] sm:$0xf]
    %v521 = vld [vmem:[%s10 + $0x18] sm:$0xf]
    %v522 = vld [vmem:[%s10 + $0x1c] sm:$0xf]
    %v523 = vld [vmem:[%s11] sm:$0x1]
    %v525 = vperm.slane %v523, 0
    %v535 = vunpack.c.l.b16 %v515
    %v536 = vunpack.c.l.b16 %v516
    %v537 = vunpack.c.l.b16 %v517
    %v538 = vunpack.c.l.b16 %v518
    %v539 = vunpack.c.l.b16 %v519
    %v540 = vunpack.c.l.b16 %v520
    %v541 = vunpack.c.l.b16 %v521
    %v542 = vunpack.c.l.b16 %v522
    %v543 = vpack.c.b16 %v536, %v535
    %v544 = vpack.c.b16 %v538, %v537
    %v545 = vpack.c.b16 %v540, %v539
    %v546 = vpack.c.b16 %v542, %v541
    %vm551 = vcmask 523264
    %v553 = vsel %vm551, %v514, 0
    %555 = vmatpush.bf16.msra.mxu0 0
    %556 = vmatpush.bf16.msra.mxu0 0
    %557 = vmatpush.bf16.msra.mxu0 0
    %558 = vmatpush.bf16.msra.mxu0 0
    %559 = vmatpush.bf16.msra.mxu0 %v546
    %560 = vmatpush.bf16.msra.mxu0 %v545
    %561 = vmatpush.bf16.msra.mxu0 %v544
    %562 = vmatpush.bf16.msra.mxu0 %v543
    %563 = vmatmul.bf16.gmra.mxu0 %v553
    %v564 = vpop.f32.mrf.mxu0
    %v565 = vadd.f32 %v525, %v564
    %v566 = vpop.f32.mrf.mxu0
    %v567 = vadd.f32 %v525, %v566
    %568 = vdwg.mxu0
    %v569 = vadd.f32 %v472, %v565
    %v570 = vadd.f32 %v473, %v567
    %v571 = vsel %vm94, %v569, 0.0
    %572 = vadd.xlane.f32.xlu0 %v571
    %v573 = vpop.xlane.xlu0 %572
    %v574 = vsel %vm94, %v570, 0.0
    %575 = vadd.xlane.f32.xlu0 %v574
    %v576 = vpop.xlane.xlu0 %575
    %v577 = vmul.f32 %v573, %v423
    %v578 = vmul.f32 %v576, %v423
    %v579 = vsub.f32 %v569, %v577
    %v580 = vsub.f32 %v570, %v578
    %v581 = vmul.f32 %v579, %v579
    %v582 = vmul.f32 %v580, %v580
    %v583 = vsel %vm94, %v581, 0.0
    %584 = vadd.xlane.f32.xlu0 %v583
    %v585 = vpop.xlane.xlu0 %584
    %v586 = vsel %vm94, %v582, 0.0
    %587 = vadd.xlane.f32.xlu0 %v586
    %v588 = vpop.xlane.xlu0 %587
    %v589 = vmul.f32 %v585, %v423
    %v590 = vmul.f32 %v588, %v423
    %v591 = vadd.f32 %v589, 1e-05
    %v592 = vadd.f32 %v590, 1e-05
    %v593 = vrsqrt.pop %v591
    %v594 = vmul.f32 %v593, %v591
    %v595 = vmul.f32 %v594, %v593
    %v596 = vmul.f32 0.5, %v595
    %v597 = vsub.f32 1.5, %v596
    %v598 = vmul.f32 %v593, %v597
    %vm599 = vweird.f32 %v591
    %vm600 = vweird.f32 %v593
    %vm601 = vmor %vm599, %vm600
    %v602 = vsel %vm601, %v593, %v598
    %v603 = vrsqrt.pop %v592
    %v604 = vmul.f32 %v603, %v592
    %v605 = vmul.f32 %v604, %v603
    %v606 = vmul.f32 0.5, %v605
    %v607 = vsub.f32 1.5, %v606
    %v608 = vmul.f32 %v603, %v607
    %vm609 = vweird.f32 %v592
    %vm610 = vweird.f32 %v603
    %vm611 = vmor %vm609, %vm610
    %v612 = vsel %vm611, %v603, %v608
    %v613 = vmul.f32 %v579, %v602
    %v614 = vmul.f32 %v580, %v612
    %v615 = vld [vmem:[%s12] sm:$0x1]
    %v617 = vperm.slane %v615, 0
    %v619 = vmul.f32 %v613, %v617
    %v620 = vmul.f32 %v614, %v617
    %v621 = vld [vmem:[%s13] sm:$0x1]
    %v623 = vperm.slane %v621, 0
    %v625 = vadd.f32 %v619, %v623
    %v626 = vadd.f32 %v620, %v623
    %627 = vst.msk [vmem:[#allocation7] sm:$0xff] %vm94, %v625
    %628 = vst.msk [vmem:[#allocation7 + $0x8] sm:$0xff] %vm94, %v626
    // Predicated region
    $region58: #{tpu_custom_call.1} parent=1 // pred_check
      _
    $region59: #{tpu_custom_call.1} parent=1 // pred_check_branch
      %630 = sbr.rel (0) target = $region61
    $region60: #{tpu_custom_call.1} parent=1 // pred_region
      %632 = vsyncadd [#allocation6], 0
      %s633 = sshll.u32 [#allocation7], 4
      %s634 = int_to_ptr.vmem [resolvable:$true] %s633
      %s635 = sshll.u32 %s14, 4
      %s636 = int_to_ptr.hbm [resolvable:$true] %s635
      %641 = dma.vmem_to_hbm [thread:$0]  %s634, 256, %s636, [#allocation6], 128, 128, 8
    $region61: #{tpu_custom_call.1} parent=1 // pred_fallthru
      _
    // Predicated region
    $region62: #{tpu_custom_call.1} parent=1 // pred_check
      _
    $region63: #{tpu_custom_call.1} parent=1 // pred_check_branch
      %643 = sbr.rel (0) target = $region65
    $region64: #{tpu_custom_call.1} parent=1 // pred_region
      %645 = dma.done [#allocation6], 256
    $region65: #{tpu_custom_call.1} parent=1 // pred_fallthru
      _
    %646 = vsyncpa [#allocation5], 1
    %647 = vsyncpa [#allocation6], 1

</llo_original>
